<compile_context>
chip_gen: v5e
topology: v5e:2x2
jax: 0.10.0
libtpu: 0.0.40
codegen_flags: <defaults>
</compile_context>

<pallas_src>
from functools import partial

import jax
import jax.numpy as jnp
from jax.experimental import pallas as pl
from jax.experimental.pallas import tpu as pltpu


def _round_up(x, m):
    return (x + m - 1) // m * m


# -----------------------------------------------------------------------------
# Weight preparation — run ONCE at weight-load time (NOT in the per-call path):
#   * transpose PyTorch (out, in) weights to (in, out) so the kernel computes
#     x @ W with no in-kernel transpose / relayout,
#   * fold the RMSNorm gain (ln_q weight) into fc1.
# -----------------------------------------------------------------------------
def prepare_patch_merger_params(ln_w, w1, b1, w2, b2, *, spatial_merge_size=2):
    merge2 = spatial_merge_size ** 2
    hidden = ln_w.shape[0]
    merged = hidden * merge2
    assert w1.shape == (merged, merged)
    assert w2.shape[1] == merged
    scale = jnp.tile(ln_w.astype(jnp.float32), merge2)                 # (merged,)
    w1t = (jnp.transpose(w1).astype(jnp.float32) * scale[:, None]).astype(w1.dtype)
    w2t = jnp.transpose(w2)                                            # (merged, out_dim)
    return w1t, b1.reshape(1, -1), w2t, b2.reshape(1, -1)


# -----------------------------------------------------------------------------
# Fused kernel:
#   x tile    : (tm, merged)   -- same block for all j (fetched once per M tile)
#   w1t tile  : (merged, tj)   -- fc1 column block, W1 pre-transposed (in, out)
#   b1 tile   : (1, tj)
#   w2t tile  : (tj, out_dim)  -- fc2 row block,   W2 pre-transposed (in, out)
#   b2 tile   : (1, out_dim)
#   o tile    : (tm, out_dim)
#   xn scratch: (tm, merged)   in w1t dtype (fed natively to the MXU)
#   acc       : (tm, out_dim)  f32 accumulator over j
# -----------------------------------------------------------------------------
def _fused_merger_kernel(x_ref, w1t_ref, b1_ref, w2t_ref, b2_ref, o_ref,
                         xn_ref, acc_ref, *, hidden, eps, n_seg):
    j = pl.program_id(1)

    @pl.when(j == 0)
    def _init():
        acc_ref[...] = jnp.zeros_like(acc_ref)
        # RMSNorm the whole (tm, merged) x panel ONCE per M tile.  The ln_q
        # gain is folded into W1 at weight-prep time, so only the
        # rsqrt(mean(x^2)) scale is applied here.  Each merged row consists of
        # merge^2 independent `hidden`-wide segments; write each normalized
        # segment back via a static slice store (no concatenate temporary).
        for s in range(n_seg):
            seg = x_ref[:, s * hidden:(s + 1) * hidden].astype(jnp.float32)
            var = jnp.mean(seg * seg, axis=-1, keepdims=True)
            xn_ref[:, s * hidden:(s + 1) * hidden] = (
                seg * jax.lax.rsqrt(var + eps)).astype(xn_ref.dtype)

    # fc1 column block: full-K reduction over `merged` (no fc1 accumulator
    # revisit), then bias + exact GELU in f32, entirely in VMEM.
    h = jnp.dot(xn_ref[...], w1t_ref[...], preferred_element_type=jnp.float32)
    h = h + b1_ref[...].astype(jnp.float32)
    h = 0.5 * h * (1.0 + jax.lax.erf(h * jnp.float32(0.7071067811865476)))

    # fc2 partial product for this column block; f32 accumulate, MXU fed in
    # the weight's native dtype.
    acc_ref[...] += jnp.dot(h.astype(w2t_ref.dtype), w2t_ref[...],
                            preferred_element_type=jnp.float32)

    @pl.when(j == pl.num_programs(1) - 1)
    def _finalize():
        o_ref[...] = (acc_ref[...] + b2_ref[...].astype(jnp.float32)
                      ).astype(o_ref.dtype)


# -----------------------------------------------------------------------------
# Wrapper (per-call path: reshape + optional row padding + one pallas_call)
# -----------------------------------------------------------------------------
def qwen25vl_patch_merger(hidden_states, w1t, b1, w2t, b2, *,
                          spatial_merge_size=2, eps=1e-6, tm=None, tj=None):
    seq, hidden = hidden_states.shape
    merge2 = spatial_merge_size ** 2
    assert seq % merge2 == 0
    rows = seq // merge2
    merged = hidden * merge2
    assert w1t.shape == (merged, merged)
    out_dim = w2t.shape[1]
    assert w2t.shape == (merged, out_dim)

    out_dtype = hidden_states.dtype

    # view(-1, hidden * merge^2): metadata-only reshape, done outside the kernel.
    x = hidden_states.reshape(rows, merged)

    x_bytes = jnp.dtype(x.dtype).itemsize
    w_bytes = jnp.dtype(w1t.dtype).itemsize
    o_bytes = jnp.dtype(out_dtype).itemsize
    row_align = 16 if x_bytes == 2 else 8          # bf16 packs 16 rows / vreg

    # ---- VMEM budget, generation aware (v7x 64 MiB vs v5e/v6e 128 MiB) ----
    try:
        vmem_cap = int(pltpu.get_tpu_info().vmem_capacity_bytes)
    except Exception:                               # no TPU info: assume smallest (v7x)
        vmem_cap = 64 * 2 ** 20
    budget = min(int(0.70 * vmem_cap), 100 * 2 ** 20)

    def vmem_need(tm_, tj_):
        return (2 * tm_ * merged * x_bytes          # x panel (double-buffered)
                + 2 * merged * tj_ * w_bytes        # W1 column block
                + 2 * tj_ * out_dim * w_bytes       # W2 row block
                + 2 * (tj_ + out_dim) * 4           # biases
                + 2 * tm_ * out_dim * o_bytes       # output block
                + tm_ * merged * w_bytes            # normalized-x scratch
                + tm_ * out_dim * 4)                # f32 accumulator

    if tm is None or tj is None:
        tj_cands = [t for t in (1024, 512, 256, 128) if merged % t == 0] or [merged]
        rows_cap = max(_round_up(rows, row_align), row_align)
        tm_cands = [t for t in (1024, 512, 384, 256, 192, 128, 64, 32, 16, 8)
                    if t % row_align == 0 and t <= rows_cap] or [row_align]
        best = None
        for tm_c in tm_cands:
            for tj_c in tj_cands:
                if vmem_need(tm_c, tj_c) > budget:
                    continue
                # fewest weight re-streams first (weight reuse is the big
                # lever in the HBM-bound regime), then largest tj, smallest tm.
                key = (pl.cdiv(rows, tm_c), -tj_c, tm_c)
                if best is None or key < best[0]:
                    best = (key, (tm_c, tj_c))
        if best is None:
            best = (None, (tm_cands[-1], tj_cands[-1]))
        tm = tm if tm is not None else best[1][0]
        tj = tj if tj is not None else best[1][1]

    assert tm % 8 == 0, "tm must be a multiple of 8"
    assert merged % tj == 0, "tj must divide merged hidden size"
    assert tj % 128 == 0 or tj == merged, "tj must be a 128-multiple (or full)"

    # Pad rows to a multiple of tm: zero rows normalize to exactly zero (eps
    # keeps rsqrt finite), and the padded output rows are sliced off below.
    rows_p = _round_up(rows, tm)
    if rows_p != rows:
        x = jnp.pad(x, ((0, rows_p - rows), (0, 0)))

    grid = (rows_p // tm, merged // tj)

    vmem_limit = int(min(max(vmem_need(tm, tj) + (4 << 20), 32 << 20),
                         int(0.85 * vmem_cap)))

    compiler_params = pltpu.CompilerParams(
        # NOTE (v7x): only the M axis is parallel; when rows_p//tm == 1 one
        # TensorCore idles, but the kernel is HBM-weight-bound at typical
        # shapes so splitting M (which re-streams the weights) would not help.
        dimension_semantics=("parallel", "arbitrary"),
        vmem_limit_bytes=vmem_limit,
    )

    grid_m = rows_p // tm
    cost = pl.CostEstimate(
        flops=int(2 * rows_p * merged * (merged + out_dim) + 8 * rows_p * merged),
        transcendentals=int(rows_p * merged + rows_p * merge2),
        bytes_accessed=int(rows_p * merged * x_bytes
                           + grid_m * (merged * merged + merged * out_dim) * w_bytes
                           + rows_p * out_dim * o_bytes),
    )

    out = pl.pallas_call(
        partial(_fused_merger_kernel, hidden=hidden, eps=eps, n_seg=merge2),
        grid=grid,
        in_specs=[
            pl.BlockSpec((tm, merged), lambda i, j: (i, 0)),    # x panel (1 DMA / M tile)
            pl.BlockSpec((merged, tj), lambda i, j: (0, j)),    # W1^T column block
            pl.BlockSpec((1, tj), lambda i, j: (0, j)),         # b1 block
            pl.BlockSpec((tj, out_dim), lambda i, j: (j, 0)),   # W2^T row block
            pl.BlockSpec((1, out_dim), lambda i, j: (0, 0)),    # b2
        ],
        out_specs=pl.BlockSpec((tm, out_dim), lambda i, j: (i, 0)),
        out_shape=jax.ShapeDtypeStruct((rows_p, out_dim), out_dtype),
        scratch_shapes=[
            pltpu.VMEM((tm, merged), w1t.dtype),                # normalized x panel
            pltpu.VMEM((tm, out_dim), jnp.float32),             # fc2 accumulator
        ],
        compiler_params=compiler_params,
        cost_estimate=cost,
    )(x, w1t, b1, w2t, b2)

    if rows_p != rows:
        out = out[:rows]
    return out


# -----------------------------------------------------------------------------
# Pure-JAX reference (uses the ORIGINAL, unfolded weights) for correctness.
# -----------------------------------------------------------------------------
def reference(hidden_states, ln_w, w1, b1, w2, b2, *, spatial_merge_size=2, eps=1e-6):
    x = hidden_states.astype(jnp.float32)
    var = jnp.mean(x * x, axis=-1, keepdims=True)
    x = x * jax.lax.rsqrt(var + eps) * ln_w.astype(jnp.float32)
    x = x.reshape(-1, hidden_states.shape[-1] * spatial_merge_size ** 2)
    h = x @ w1.astype(jnp.float32).T + b1.astype(jnp.float32)
    h = 0.5 * h * (1.0 + jax.lax.erf(h / jnp.sqrt(2.0)))
    y = h @ w2.astype(jnp.float32).T + b2.astype(jnp.float32)
    return y.astype(hidden_states.dtype)


if __name__ == "__main__":
    # Small synthetic config consistent with the module:
    #   config.hidden_size = 128, config.spatial_merge_size = 2
    #   merged hidden = 128 * 2**2 = 512, mlp out dim = 64, num_patches = 64
    hidden_size = 128
    spatial_merge_size = 2
    merge2 = spatial_merge_size ** 2
    merged = hidden_size * merge2          # 512
    out_hidden = 64
    seq = 64                               # -> rows = 16

    key = jax.random.PRNGKey(0)
    k0, k1, k2, k3, k4, k5 = jax.random.split(key, 6)

    hidden_states = jax.random.normal(k0, (seq, hidden_size), dtype=jnp.float32)
    ln_w = 1.0 + 0.1 * jax.random.normal(k1, (hidden_size,), dtype=jnp.float32)
    w1 = 0.05 * jax.random.normal(k2, (merged, merged), dtype=jnp.float32)      # fc1: (out, in)
    b1 = 0.01 * jax.random.normal(k3, (merged,), dtype=jnp.float32)
    w2 = 0.05 * jax.random.normal(k4, (out_hidden, merged), dtype=jnp.float32)  # fc2: (out, in)
    b2 = 0.01 * jax.random.normal(k5, (out_hidden,), dtype=jnp.float32)

    # Once-per-model weight prep (transpose + RMSNorm-gain folding).
    params = prepare_patch_merger_params(ln_w, w1, b1, w2, b2,
                                         spatial_merge_size=spatial_merge_size)

    ref = reference(hidden_states, ln_w, w1, b1, w2, b2,
                    spatial_merge_size=spatial_merge_size, eps=1e-6)

    # (a) explicit small tiles -> grid (2, 4): exercises the multi-step M axis,
    #     the j-accumulator revisit and the j==0 scratch-fill guard.
    out_a = qwen25vl_patch_merger(hidden_states, *params,
                                  spatial_merge_size=spatial_merge_size,
                                  eps=1e-6, tm=8, tj=128)
    out_a = jax.block_until_ready(out_a)
    assert out_a.shape == (seq // merge2, out_hidden)
    assert jnp.allclose(out_a, ref, atol=1e-4, rtol=1e-4), "mismatch (explicit tiles)"

    # (b) auto tile plan (VMEM-budget driven, single-step grid at this size).
    out_b = qwen25vl_patch_merger(hidden_states, *params,
                                  spatial_merge_size=spatial_merge_size, eps=1e-6)
    out_b = jax.block_until_ready(out_b)
    assert jnp.allclose(out_b, ref, atol=1e-4, rtol=1e-4), "mismatch (auto tiles)"

    # (c) ragged row count -> exercises the row-padding path (rows=18, tm=8).
    seq_c = 72
    hs_c = jax.random.normal(jax.random.PRNGKey(1), (seq_c, hidden_size),
                             dtype=jnp.float32)
    ref_c = reference(hs_c, ln_w, w1, b1, w2, b2,
                      spatial_merge_size=spatial_merge_size, eps=1e-6)
    out_c = qwen25vl_patch_merger(hs_c, *params,
                                  spatial_merge_size=spatial_merge_size,
                                  eps=1e-6, tm=8, tj=128)
    out_c = jax.block_until_ready(out_c)
    assert out_c.shape == (seq_c // merge2, out_hidden)
    assert jnp.allclose(out_c, ref_c, atol=1e-4, rtol=1e-4), "mismatch (padded rows)"

    print("KERNEL_OK")
</pallas_src>

<mosaic_0001>
module attributes {stable_mosaic.version = 11 : i64} {
  func.func @_fused_merger_kernel(%arg0: i32, %arg1: i32, %arg2: memref<8x512xf32, #tpu.memory_space<vmem>>, %arg3: memref<512x128xf32, #tpu.memory_space<vmem>>, %arg4: memref<1x128xf32, #tpu.memory_space<vmem>>, %arg5: memref<128x64xf32, #tpu.memory_space<vmem>>, %arg6: memref<1x64xf32, #tpu.memory_space<vmem>>, %arg7: memref<8x64xf32, #tpu.memory_space<vmem>>, %arg8: memref<8x512xf32, #tpu.memory_space<vmem>>, %arg9: memref<8x64xf32, #tpu.memory_space<vmem>>) attributes {dimension_semantics = [#tpu.dimension_semantics<parallel>, #tpu.dimension_semantics<arbitrary>], iteration_bounds = array<i64: 2, 4>, scalar_prefetch = 0 : i64, scratch_operands = 2 : i64, tpu.core_type = #tpu.core_type<tc>, window_params = [{transform_indices = @transform_0, window_bounds = array<i64: 8, 512>}, {transform_indices = @transform_1, window_bounds = array<i64: 512, 128>}, {transform_indices = @transform_2, window_bounds = array<i64: 1, 128>}, {transform_indices = @transform_3, window_bounds = array<i64: 128, 64>}, {pipeline_mode = #tpu.pipeline_mode<synchronous>, transform_indices = @transform_4, window_bounds = array<i64: 1, 64>}, {transform_indices = @transform_5, window_bounds = array<i64: 8, 64>}]} {
    %c0_i32 = arith.constant 0 : i32
    %0 = arith.cmpi eq, %arg1, %c0_i32 : i32
    %1 = arith.extui %0 : i1 to i32
    %c0_i32_0 = arith.constant 0 : i32
    %2 = arith.cmpi ne, %1, %c0_i32_0 : i32
    scf.if %2 {
      %cst_17 = arith.constant 0.000000e+00 : f32
      %25 = vector.broadcast %cst_17 : f32 to vector<8x64xf32>
      %c0_18 = arith.constant 0 : index
      %c0_19 = arith.constant 0 : index
      %26 = vector.load %arg9[%c0_18, %c0_19] : memref<8x64xf32, #tpu.memory_space<vmem>>, vector<8x64xf32>
      tpu.vector_store %arg9[%c0_18, %c0_19], %25 {strides = array<i32>} : memref<8x64xf32, #tpu.memory_space<vmem>>, vector<8x64xf32>,
      %c0_20 = arith.constant 0 : index
      %c0_21 = arith.constant 0 : index
      %27 = vector.load %arg2[%c0_20, %c0_21] : memref<8x512xf32, #tpu.memory_space<vmem>>, vector<8x128xf32>
      %28 = arith.mulf %27, %27 : vector<8x128xf32>
      %cst_22 = arith.constant dense<0.000000e+00> : vector<8xf32>
      %29 = vector.multi_reduction <add>, %28, %cst_22 [1] : vector<8x128xf32> to vector<8xf32>
      %30 = vector.shape_cast %29 : vector<8xf32> to vector<8x1xf32>
      %cst_23 = arith.constant 1.280000e+02 : f32
      %31 = vector.broadcast %cst_23 : f32 to vector<8x1xf32>
      %32 = arith.divf %30, %31 : vector<8x1xf32>
      %cst_24 = arith.constant 9.99999997E-7 : f32
      %33 = vector.broadcast %cst_24 : f32 to vector<8x1xf32>
      %34 = arith.addf %32, %33 : vector<8x1xf32>
      %35 = math.rsqrt %34 : vector<8x1xf32>
      %36 = vector.broadcast %35 : vector<8x1xf32> to vector<8x128xf32>
      %37 = arith.mulf %27, %36 : vector<8x128xf32>
      %c0_25 = arith.constant 0 : index
      %c0_26 = arith.constant 0 : index
      %38 = vector.load %arg8[%c0_25, %c0_26] : memref<8x512xf32, #tpu.memory_space<vmem>>, vector<8x128xf32>
      tpu.vector_store %arg8[%c0_25, %c0_26], %37 {strides = array<i32>} : memref<8x512xf32, #tpu.memory_space<vmem>>, vector<8x128xf32>,
      %c0_27 = arith.constant 0 : index
      %c128 = arith.constant 128 : index
      %39 = vector.load %arg2[%c0_27, %c128] : memref<8x512xf32, #tpu.memory_space<vmem>>, vector<8x128xf32>
      %40 = arith.mulf %39, %39 : vector<8x128xf32>
      %cst_28 = arith.constant dense<0.000000e+00> : vector<8xf32>
      %41 = vector.multi_reduction <add>, %40, %cst_28 [1] : vector<8x128xf32> to vector<8xf32>
      %42 = vector.shape_cast %41 : vector<8xf32> to vector<8x1xf32>
      %cst_29 = arith.constant 1.280000e+02 : f32
      %43 = vector.broadcast %cst_29 : f32 to vector<8x1xf32>
      %44 = arith.divf %42, %43 : vector<8x1xf32>
      %cst_30 = arith.constant 9.99999997E-7 : f32
      %45 = vector.broadcast %cst_30 : f32 to vector<8x1xf32>
      %46 = arith.addf %44, %45 : vector<8x1xf32>
      %47 = math.rsqrt %46 : vector<8x1xf32>
      %48 = vector.broadcast %47 : vector<8x1xf32> to vector<8x128xf32>
      %49 = arith.mulf %39, %48 : vector<8x128xf32>
      %c0_31 = arith.constant 0 : index
      %c128_32 = arith.constant 128 : index
      %50 = vector.load %arg8[%c0_31, %c128_32] : memref<8x512xf32, #tpu.memory_space<vmem>>, vector<8x128xf32>
      tpu.vector_store %arg8[%c0_31, %c128_32], %49 {strides = array<i32>} : memref<8x512xf32, #tpu.memory_space<vmem>>, vector<8x128xf32>,
      %c0_33 = arith.constant 0 : index
      %c256 = arith.constant 256 : index
      %51 = vector.load %arg2[%c0_33, %c256] : memref<8x512xf32, #tpu.memory_space<vmem>>, vector<8x128xf32>
      %52 = arith.mulf %51, %51 : vector<8x128xf32>
      %cst_34 = arith.constant dense<0.000000e+00> : vector<8xf32>
      %53 = vector.multi_reduction <add>, %52, %cst_34 [1] : vector<8x128xf32> to vector<8xf32>
      %54 = vector.shape_cast %53 : vector<8xf32> to vector<8x1xf32>
      %cst_35 = arith.constant 1.280000e+02 : f32
      %55 = vector.broadcast %cst_35 : f32 to vector<8x1xf32>
      %56 = arith.divf %54, %55 : vector<8x1xf32>
      %cst_36 = arith.constant 9.99999997E-7 : f32
      %57 = vector.broadcast %cst_36 : f32 to vector<8x1xf32>
      %58 = arith.addf %56, %57 : vector<8x1xf32>
      %59 = math.rsqrt %58 : vector<8x1xf32>
      %60 = vector.broadcast %59 : vector<8x1xf32> to vector<8x128xf32>
      %61 = arith.mulf %51, %60 : vector<8x128xf32>
      %c0_37 = arith.constant 0 : index
      %c256_38 = arith.constant 256 : index
      %62 = vector.load %arg8[%c0_37, %c256_38] : memref<8x512xf32, #tpu.memory_space<vmem>>, vector<8x128xf32>
      tpu.vector_store %arg8[%c0_37, %c256_38], %61 {strides = array<i32>} : memref<8x512xf32, #tpu.memory_space<vmem>>, vector<8x128xf32>,
      %c0_39 = arith.constant 0 : index
      %c384 = arith.constant 384 : index
      %63 = vector.load %arg2[%c0_39, %c384] : memref<8x512xf32, #tpu.memory_space<vmem>>, vector<8x128xf32>
      %64 = arith.mulf %63, %63 : vector<8x128xf32>
      %cst_40 = arith.constant dense<0.000000e+00> : vector<8xf32>
      %65 = vector.multi_reduction <add>, %64, %cst_40 [1] : vector<8x128xf32> to vector<8xf32>
      %66 = vector.shape_cast %65 : vector<8xf32> to vector<8x1xf32>
      %cst_41 = arith.constant 1.280000e+02 : f32
      %67 = vector.broadcast %cst_41 : f32 to vector<8x1xf32>
      %68 = arith.divf %66, %67 : vector<8x1xf32>
      %cst_42 = arith.constant 9.99999997E-7 : f32
      %69 = vector.broadcast %cst_42 : f32 to vector<8x1xf32>
      %70 = arith.addf %68, %69 : vector<8x1xf32>
      %71 = math.rsqrt %70 : vector<8x1xf32>
      %72 = vector.broadcast %71 : vector<8x1xf32> to vector<8x128xf32>
      %73 = arith.mulf %63, %72 : vector<8x128xf32>
      %c0_43 = arith.constant 0 : index
      %c384_44 = arith.constant 384 : index
      %74 = vector.load %arg8[%c0_43, %c384_44] : memref<8x512xf32, #tpu.memory_space<vmem>>, vector<8x128xf32>
      tpu.vector_store %arg8[%c0_43, %c384_44], %73 {strides = array<i32>} : memref<8x512xf32, #tpu.memory_space<vmem>>, vector<8x128xf32>,
    } else {
    }
    %c0 = arith.constant 0 : index
    %c0_1 = arith.constant 0 : index
    %3 = vector.load %arg8[%c0, %c0_1] : memref<8x512xf32, #tpu.memory_space<vmem>>, vector<8x512xf32>
    %c0_2 = arith.constant 0 : index
    %c0_3 = arith.constant 0 : index
    %4 = vector.load %arg3[%c0_2, %c0_3] : memref<512x128xf32, #tpu.memory_space<vmem>>, vector<512x128xf32>
    %cst = arith.constant dense<0.000000e+00> : vector<8x128xf32>
    %5 = tpu.matmul %3, %4, %cst {dimension_numbers = #tpu.dot_dimension_numbers<[1], [0], [0], [1], [0, 0, 1, 1], [], []>} : vector<8x512xf32>, vector<512x128xf32>, vector<8x128xf32> -> vector<8x128xf32>
    %c0_4 = arith.constant 0 : index
    %c0_5 = arith.constant 0 : index
    %6 = vector.load %arg4[%c0_4, %c0_5] : memref<1x128xf32, #tpu.memory_space<vmem>>, vector<1x128xf32>
    %7 = vector.broadcast %6 : vector<1x128xf32> to vector<8x128xf32>
    %8 = arith.addf %5, %7 : vector<8x128xf32>
    %cst_6 = arith.constant 5.000000e-01 : f32
    %9 = vector.broadcast %cst_6 : f32 to vector<8x128xf32>
    %10 = arith.mulf %9, %8 : vector<8x128xf32>
    %cst_7 = arith.constant 0.707106769 : f32
    %11 = vector.broadcast %cst_7 : f32 to vector<8x128xf32>
    %12 = arith.mulf %8, %11 : vector<8x128xf32>
    %13 = math.erf %12 : vector<8x128xf32>
    %cst_8 = arith.constant 1.000000e+00 : f32
    %14 = vector.broadcast %cst_8 : f32 to vector<8x128xf32>
    %15 = arith.addf %14, %13 : vector<8x128xf32>
    %16 = arith.mulf %10, %15 : vector<8x128xf32>
    %c0_9 = arith.constant 0 : index
    %c0_10 = arith.constant 0 : index
    %17 = vector.load %arg9[%c0_9, %c0_10] : memref<8x64xf32, #tpu.memory_space<vmem>>, vector<8x64xf32>
    %c0_11 = arith.constant 0 : index
    %c0_12 = arith.constant 0 : index
    %18 = vector.load %arg5[%c0_11, %c0_12] : memref<128x64xf32, #tpu.memory_space<vmem>>, vector<128x64xf32>
    %cst_13 = arith.constant dense<0.000000e+00> : vector<8x64xf32>
    %19 = tpu.matmul %16, %18, %cst_13 {dimension_numbers = #tpu.dot_dimension_numbers<[1], [0], [0], [1], [0, 0, 1, 1], [], []>} : vector<8x128xf32>, vector<128x64xf32>, vector<8x64xf32> -> vector<8x64xf32>
    %20 = arith.addf %17, %19 : vector<8x64xf32>
    %c0_14 = arith.constant 0 : index
    %c0_15 = arith.constant 0 : index
    %21 = vector.load %arg9[%c0_14, %c0_15] : memref<8x64xf32, #tpu.memory_space<vmem>>, vector<8x64xf32>
    tpu.vector_store %arg9[%c0_14, %c0_15], %20 {strides = array<i32>} : memref<8x64xf32, #tpu.memory_space<vmem>>, vector<8x64xf32>,
    %c3_i32 = arith.constant 3 : i32
    %22 = arith.cmpi eq, %arg1, %c3_i32 : i32
    %23 = arith.extui %22 : i1 to i32
    %c0_i32_16 = arith.constant 0 : i32
    %24 = arith.cmpi ne, %23, %c0_i32_16 : i32
    scf.if %24 {
      %c0_17 = arith.constant 0 : index
      %c0_18 = arith.constant 0 : index
      %25 = vector.load %arg9[%c0_17, %c0_18] : memref<8x64xf32, #tpu.memory_space<vmem>>, vector<8x64xf32>
      %c0_19 = arith.constant 0 : index
      %c0_20 = arith.constant 0 : index
      %26 = vector.load %arg6[%c0_19, %c0_20] : memref<1x64xf32, #tpu.memory_space<vmem>>, vector<1x64xf32>
      %27 = vector.broadcast %26 : vector<1x64xf32> to vector<8x64xf32>
      %28 = arith.addf %25, %27 : vector<8x64xf32>
      %c0_21 = arith.constant 0 : index
      %c0_22 = arith.constant 0 : index
      %29 = vector.load %arg7[%c0_21, %c0_22] : memref<8x64xf32, #tpu.memory_space<vmem>>, vector<8x64xf32>
      tpu.vector_store %arg7[%c0_21, %c0_22], %28 {strides = array<i32>} : memref<8x64xf32, #tpu.memory_space<vmem>>, vector<8x64xf32>,
    } else {
    }
    return
  }
  func.func @transform_0(%arg0: i32, %arg1: i32) -> (i32, i32) {
    %c0_i32 = arith.constant 0 : i32
    %c0_i32_0 = arith.constant 0 : i32
    return %arg0, %c0_i32 : i32, i32
  }
  func.func @transform_1(%arg0: i32, %arg1: i32) -> (i32, i32) {
    %c0_i32 = arith.constant 0 : i32
    %c0_i32_0 = arith.constant 0 : i32
    return %c0_i32, %arg1 : i32, i32
  }
  func.func @transform_2(%arg0: i32, %arg1: i32) -> (i32, i32) {
    %c0_i32 = arith.constant 0 : i32
    %c0_i32_0 = arith.constant 0 : i32
    return %c0_i32, %arg1 : i32, i32
  }
  func.func @transform_3(%arg0: i32, %arg1: i32) -> (i32, i32) {
    %c0_i32 = arith.constant 0 : i32
    %c0_i32_0 = arith.constant 0 : i32
    return %arg1, %c0_i32 : i32, i32
  }
  func.func @transform_4(%arg0: i32, %arg1: i32) -> (i32, i32) {
    %c0_i32 = arith.constant 0 : i32
    %c0_i32_0 = arith.constant 0 : i32
    %c0_i32_1 = arith.constant 0 : i32
    return %c0_i32, %c0_i32_0 : i32, i32
  }
  func.func @transform_5(%arg0: i32, %arg1: i32) -> (i32, i32) {
    %c0_i32 = arith.constant 0 : i32
    %c0_i32_0 = arith.constant 0 : i32
    return %arg0, %c0_i32 : i32, i32
  }
}

</mosaic_0001>

<llo_original>
// kernel: tpu_custom_call.1
$region0: #{tpu_custom_call.1}
  #allocation0 [shape = 'u32[]', space=smem, size = 0x4, offset = 0x4, fixed_abs, tag = 'smem constant byte address 0x4 - core index']
  #allocation1 [shape = 'u32[72,128]{1,0:T(1,128)}', space=vmem, size = 0x9000, scoped, tag = 'internal scratch']
  #allocation2 [shape = 'f32[8,512]{1,0:T(8,128)}', space=vmem, size = 0x4000, scoped, tag = 'scratch operand']
  #allocation3 [shape = 'f32[8,64]{1,0:T(8,128)}', space=vmem, size = 0x1000, scoped, tag = 'scratch operand']
  %s0 = inlined_call_operand.vmem [shape: f32[16,512], index: 0, kind: input, shape index: {}]
  %s1 = inlined_call_operand.hbm [shape: f32[512,512], index: 1, kind: input, shape index: {}]
  %s2 = inlined_call_operand.vmem [shape: f32[1,512], index: 2, kind: input, shape index: {}]
  %s3 = inlined_call_operand.vmem [shape: f32[512,64], index: 3, kind: input, shape index: {}]
  %s4 = inlined_call_operand.vmem [shape: f32[1,64], index: 4, kind: input, shape index: {}]
  %s5 = inlined_call_operand.hbm [shape: f32[16,64], index: 5, kind: output, shape index: {}]
  %s6 = sld [smem:[#allocation0]]
  $region65: #{tpu_custom_call.1} parent=0
    _
  %s8 = ssub.s32 1, %s6
  %s9 = scalar_select 0, %s8, %s6
  $region1: #{tpu_custom_call.1} parent=0
    #allocation4 [shape = 'u8[524288]{0}', space=vmem, size = 0x80000, scoped, tag = 'input window, operand 1']
    #allocation5 [shape = 's32[2]{0}', space=sflag, size = 0x8, scoped, tag = 'scoped memory for tpu_custom_call.1']
    #allocation6 [shape = 's32[2]{0}', space=sflag, size = 0x8, scoped, tag = 'scoped memory for tpu_custom_call.1']
    #allocation7 [shape = 'u8[8192]{0}', space=vmem, size = 0x2000, scoped, tag = 'output window, operand 0']
    %10 = vsyncpa [#allocation5], 0
    %s11 = scalar_lea.sflag [#allocation5], 1
    %12 = vsyncpa %s11, 0
    %13 = vsyncpa [#allocation6], 0
    %s14 = scalar_lea.sflag [#allocation6], 1
    %15 = vsyncpa %s14, 0
    loop: start=0, step=1, limit=10
    $region2: #{tpu_custom_call.1} parent=1 // loop_pre_header
      _
    $region3: #{tpu_custom_call.1} parent=1 // loop_header
      %s17 = sphi 0, %s21
      %p18 = scmp.ge.s32.totalorder %s17, 10
      %s24 = sphi 0, %s36
      %s25 = sphi 0, %s32
      %s26 = sphi 0, %s24
      %s27 = sphi 0, %s25
      %s28 = sphi 0, %s26
      %s29 = sphi 0, %s27
      %s39 = sphi 0, %s41
      %s42 = sphi 0, %s39
      %s43 = sphi 0, %s42
      %s59 = sphi 0, %s43
      %s65 = sphi 0, %s67
      %s68 = sphi 0, %s65
      %s69 = sphi 0, %s68
      %s85 = sphi 0, %s69
      %s91 = sphi 0, %s93
      %s94 = sphi 0, %s91
      %s95 = sphi 0, %s94
      %s111 = sphi 0, %s95
      %s117 = sphi 0, %s119
      %s120 = sphi 0, %s117
      %s121 = sphi 0, %s120
      %s137 = sphi 0, %s121
      %s141 = sphi 0, %s141
      %s143 = sphi 0, %s141
      %s144 = sphi 0, %s143
      %s158 = sphi 0, %s144
      %s164 = sphi 0, %s166
      %s167 = sphi 0, %s164
      %s168 = sphi 0, %s167
      %s184 = sphi 0, %s168
    $region4: #{tpu_custom_call.1} parent=1 // loop_header_branch
      %20 = sbr.rel (%p18) target = $region8
    $region5: #{tpu_custom_call.1} parent=1 // loop_body
      %s22 = ssub.s32 %s17, 1
      %s23 = ssub.s32 %s17, 2
      %s30 = sadd.s32 1, %s25
      %p31 = scmp.ge.s32.totalorder %s30, 4
      %s32 = scalar_select %p31, 0, %s30
      %s33 = sadd.s32 1, %s24
      %s34 = scalar_select %p31, %s33, %s24
      %p35 = scmp.ge.s32.totalorder %s34, 2
      %s36 = scalar_select %p35, 0, %s34
      %s37 = ssub.s32 %s24, %s36
      %p38 = scmp.eq.s32.totalorder %s37, 0
      %s40 = sadd.s32 %s39, 1
      %s41 = scalar_select %p38, %s39, %s40
      %p44 = pneg %p38
      %p45 = scmp.eq.s32.totalorder %s17, 7
      %p46 = por %p44, %p45
      %p47 = scmp.ne.s32.totalorder %s39, %s42
      %p48 = scmp.eq.s32.totalorder %s17, 0
      %p49 = por %p47, %p48
      %p50 = scmp.ne.s32.totalorder %s39, %s42
      %p51 = scmp.eq.s32.totalorder %s22, 7
      %p52 = por %p50, %p51
      %p53 = scmp.ne.s32.totalorder %s42, %s43
      %p54 = scmp.eq.s32.totalorder %s22, 0
      %p55 = por %p53, %p54
      %p56 = scmp.ne.s32.totalorder %s42, %s43
      %p57 = scmp.eq.s32.totalorder %s23, 7
      %p58 = por %p56, %p57
      %p60 = scmp.ne.s32.totalorder %s43, %s59
      %p61 = scmp.eq.s32.totalorder %s23, 0
      %p62 = por %p60, %p61
      %s63 = ssub.s32 %s25, %s32
      %p64 = scmp.eq.s32.totalorder %s63, 0
      %s66 = sadd.s32 %s65, 1
      %s67 = scalar_select %p64, %s65, %s66
      %p70 = pneg %p64
      %p71 = scmp.eq.s32.totalorder %s17, 7
      %p72 = por %p70, %p71
      %p73 = scmp.ne.s32.totalorder %s65, %s68
      %p74 = scmp.eq.s32.totalorder %s17, 0
      %p75 = por %p73, %p74
      %p76 = scmp.ne.s32.totalorder %s65, %s68
      %p77 = scmp.eq.s32.totalorder %s22, 7
      %p78 = por %p76, %p77
      %p79 = scmp.ne.s32.totalorder %s68, %s69
      %p80 = scmp.eq.s32.totalorder %s22, 0
      %p81 = por %p79, %p80
      %p82 = scmp.ne.s32.totalorder %s68, %s69
      %p83 = scmp.eq.s32.totalorder %s23, 7
      %p84 = por %p82, %p83
      %p86 = scmp.ne.s32.totalorder %s69, %s85
      %p87 = scmp.eq.s32.totalorder %s23, 0
      %p88 = por %p86, %p87
      %s89 = ssub.s32 %s25, %s32
      %p90 = scmp.eq.s32.totalorder %s89, 0
      %s92 = sadd.s32 %s91, 1
      %s93 = scalar_select %p90, %s91, %s92
      %p96 = pneg %p90
      %p97 = scmp.eq.s32.totalorder %s17, 7
      %p98 = por %p96, %p97
      %p99 = scmp.ne.s32.totalorder %s91, %s94
      %p100 = scmp.eq.s32.totalorder %s17, 0
      %p101 = por %p99, %p100
      %p102 = scmp.ne.s32.totalorder %s91, %s94
      %p103 = scmp.eq.s32.totalorder %s22, 7
      %p104 = por %p102, %p103
      %p105 = scmp.ne.s32.totalorder %s94, %s95
      %p106 = scmp.eq.s32.totalorder %s22, 0
      %p107 = por %p105, %p106
      %p108 = scmp.ne.s32.totalorder %s94, %s95
      %p109 = scmp.eq.s32.totalorder %s23, 7
      %p110 = por %p108, %p109
      %p112 = scmp.ne.s32.totalorder %s95, %s111
      %p113 = scmp.eq.s32.totalorder %s23, 0
      %p114 = por %p112, %p113
      %s115 = ssub.s32 %s25, %s32
      %p116 = scmp.eq.s32.totalorder %s115, 0
      %s118 = sadd.s32 %s117, 1
      %s119 = scalar_select %p116, %s117, %s118
      %p122 = pneg %p116
      %p123 = scmp.eq.s32.totalorder %s17, 7
      %p124 = por %p122, %p123
      %p125 = scmp.ne.s32.totalorder %s117, %s120
      %p126 = scmp.eq.s32.totalorder %s17, 0
      %p127 = por %p125, %p126
      %p128 = scmp.ne.s32.totalorder %s117, %s120
      %p129 = scmp.eq.s32.totalorder %s22, 7
      %p130 = por %p128, %p129
      %p131 = scmp.ne.s32.totalorder %s120, %s121
      %p132 = scmp.eq.s32.totalorder %s22, 0
      %p133 = por %p131, %p132
      %p134 = scmp.ne.s32.totalorder %s120, %s121
      %p135 = scmp.eq.s32.totalorder %s23, 7
      %p136 = por %p134, %p135
      %p138 = scmp.ne.s32.totalorder %s121, %s137
      %p139 = scmp.eq.s32.totalorder %s23, 0
      %p140 = por %p138, %p139
      %s142 = sadd.s32 %s141, 1
      %p145 = scmp.eq.s32.totalorder %s17, 7
      %p146 = scmp.ne.s32.totalorder %s141, %s143
      %p147 = scmp.eq.s32.totalorder %s17, 0
      %p148 = por %p146, %p147
      %p149 = scmp.ne.s32.totalorder %s141, %s143
      %p150 = scmp.eq.s32.totalorder %s22, 7
      %p151 = por %p149, %p150
      %p152 = scmp.ne.s32.totalorder %s143, %s144
      %p153 = scmp.eq.s32.totalorder %s22, 0
      %p154 = por %p152, %p153
      %p155 = scmp.ne.s32.totalorder %s143, %s144
      %p156 = scmp.eq.s32.totalorder %s23, 7
      %p157 = por %p155, %p156
      %p159 = scmp.ne.s32.totalorder %s144, %s158
      %p160 = scmp.eq.s32.totalorder %s23, 0
      %p161 = por %p159, %p160
      %s162 = ssub.s32 %s24, %s36
      %p163 = scmp.eq.s32.totalorder %s162, 0
      %s165 = sadd.s32 %s164, 1
      %s166 = scalar_select %p163, %s164, %s165
      %p169 = pneg %p163
      %p170 = scmp.eq.s32.totalorder %s17, 7
      %p171 = por %p169, %p170
      %p172 = scmp.ne.s32.totalorder %s164, %s167
      %p173 = scmp.eq.s32.totalorder %s17, 0
      %p174 = por %p172, %p173
      %p175 = scmp.ne.s32.totalorder %s164, %s167
      %p176 = scmp.eq.s32.totalorder %s22, 7
      %p177 = por %p175, %p176
      %p178 = scmp.ne.s32.totalorder %s167, %s168
      %p179 = scmp.eq.s32.totalorder %s22, 0
      %p180 = por %p178, %p179
      %p181 = scmp.ne.s32.totalorder %s167, %s168
      %p182 = scmp.eq.s32.totalorder %s23, 7
      %p183 = por %p181, %p182
      %p185 = scmp.ne.s32.totalorder %s168, %s184
      %p186 = scmp.eq.s32.totalorder %s23, 0
      %p187 = por %p185, %p186
      %p188 = scmp.le.s32.totalorder 1, %s17
      %p189 = scmp.lt.s32.totalorder %s17, 9
      %p190 = pnand %p188, %p189
      %p191 = pneg %p190
      // Predicated region
      $region9: #{tpu_custom_call.1} parent=5 // pred_check
        _
      $region10: #{tpu_custom_call.1} parent=5 // pred_check_branch
        %193 = sbr.rel (%p190) target = $region12
      $region11: #{tpu_custom_call.1} parent=5 // pred_region
        %s194 = ssub.s32 %s17, 1
        // Predicated region
        $region13: #{tpu_custom_call.1} parent=11 // pred_check
          %p195 = pneg %p154
        $region14: #{tpu_custom_call.1} parent=11 // pred_check_branch
          %197 = sbr.rel (%p195) target = $region16
        $region15: #{tpu_custom_call.1} parent=11 // pred_region
          _
        $region16: #{tpu_custom_call.1} parent=11 // pred_fallthru
          _
      $region12: #{tpu_custom_call.1} parent=5 // pred_fallthru
        _
      %p198 = scmp.lt.s32.totalorder %s17, 8
      // Predicated region
      $region17: #{tpu_custom_call.1} parent=5 // pred_check
        %p199 = pneg %p198
      $region18: #{tpu_custom_call.1} parent=5 // pred_check_branch
        %201 = sbr.rel (%p199) target = $region20
      $region19: #{tpu_custom_call.1} parent=5 // pred_region
        // Predicated region
        $region21: #{tpu_custom_call.1} parent=19 // pred_check
          %p202 = pneg %p49
        $region22: #{tpu_custom_call.1} parent=19 // pred_check_branch
          %204 = sbr.rel (%p202) target = $region24
        $region23: #{tpu_custom_call.1} parent=19 // pred_region
          %p205 = scmp.lt.s32.totalorder %s24, 1
          %s206 = scalar_select %p205, %s24, 1
          %s207 = smul.addr %s206, 4
          %s208 = smul.addr %s207, 8
          %s209 = scalar_lea.vmem %s0, %s208
        $region24: #{tpu_custom_call.1} parent=19 // pred_fallthru
          _
        // Predicated region
        $region25: #{tpu_custom_call.1} parent=19 // pred_check
          %p210 = pneg %p75
        $region26: #{tpu_custom_call.1} parent=19 // pred_check_branch
          %212 = sbr.rel (%p210) target = $region28
        $region27: #{tpu_custom_call.1} parent=19 // pred_region
          %s213 = sand.u32 %s65, 1
          %s214 = scalar_lea.sflag [#allocation5], %s213
          %s215 = sand.u32 %s65, 1
          %s216 = smul.addr %s215, 512
          %s217 = scalar_lea.vmem [#allocation4], %s216
          %219 = vsyncadd %s214, 0
          %s220 = smul.addr %s25, 8
          %s221 = scalar_lea.hbm %s1, %s220
          %s222 = sshll.u32 %s221, 4
          %s223 = int_to_ptr.hbm [resolvable:$true] %s222
          %s224 = sshll.u32 %s217, 4
          %s225 = int_to_ptr.vmem [resolvable:$true] %s224
          %230 = dma.hbm_to_vmem [thread:$0]  %s223, 8192, %s225, %s214, 512, 128, 8
        $region28: #{tpu_custom_call.1} parent=19 // pred_fallthru
          _
        // Predicated region
        $region29: #{tpu_custom_call.1} parent=19 // pred_check
          %p231 = pneg %p101
        $region30: #{tpu_custom_call.1} parent=19 // pred_check_branch
          %233 = sbr.rel (%p231) target = $region32
        $region31: #{tpu_custom_call.1} parent=19 // pred_region
          %p234 = scmp.lt.s32.totalorder %s25, 3
          %s235 = scalar_select %p234, %s25, 3
          %s236 = scalar_lea.vmem %s2, %s235
        $region32: #{tpu_custom_call.1} parent=19 // pred_fallthru
          _
        // Predicated region
        $region33: #{tpu_custom_call.1} parent=19 // pred_check
          %p237 = pneg %p127
        $region34: #{tpu_custom_call.1} parent=19 // pred_check_branch
          %239 = sbr.rel (%p237) target = $region36
        $region35: #{tpu_custom_call.1} parent=19 // pred_region
          %s240 = smul.u32 16, %s25
          %p241 = scmp.lt.s32.totalorder %s240, 63
          %s242 = scalar_select %p241, %s240, 63
          %s243 = smul.addr %s242, 8
          %s244 = scalar_lea.vmem %s3, %s243
          %s245 = smul.u32 16, %s25
        $region36: #{tpu_custom_call.1} parent=19 // pred_fallthru
          _
      $region20: #{tpu_custom_call.1} parent=5 // pred_fallthru
        _
      %p246 = scmp.le.s32.totalorder 1, %s17
      %p247 = scmp.lt.s32.totalorder %s17, 9
      %p248 = pnand %p246, %p247
      %p249 = pneg %p248
      // Predicated region
      $region37: #{tpu_custom_call.1} parent=5 // pred_check
        _
      $region38: #{tpu_custom_call.1} parent=5 // pred_check_branch
        %251 = sbr.rel (%p248) target = $region40
      $region39: #{tpu_custom_call.1} parent=5 // pred_region
        %s252 = ssub.s32 %s17, 1
        %s253 = sand.u32 %s68, 1
        %s254 = scalar_lea.sflag [#allocation5], %s253
        %s255 = sand.u32 %s68, 1
        %s256 = smul.addr %s255, 512
        %s257 = scalar_lea.vmem [#allocation4], %s256
        // Predicated region
        $region41: #{tpu_custom_call.1} parent=39 // pred_check
          %p258 = pneg %p81
        $region42: #{tpu_custom_call.1} parent=39 // pred_check_branch
          %260 = sbr.rel (%p258) target = $region44
        $region43: #{tpu_custom_call.1} parent=39 // pred_region
          %262 = dma.done %s254, 8192
        $region44: #{tpu_custom_call.1} parent=39 // pred_fallthru
          _
        %p263 = scmp.lt.s32.totalorder %s26, 1
        %s264 = scalar_select %p263, %s26, 1
        %s265 = smul.addr %s264, 4
        %s266 = smul.addr %s265, 8
        %s267 = scalar_lea.vmem %s0, %s266
        %p268 = pneg %p55
        %p269 = pneg %p52
        %s270 = sand.u32 %s68, 1
        %s271 = scalar_lea.sflag [#allocation5], %s270
        %s272 = sand.u32 %s68, 1
        %s273 = smul.addr %s272, 512
        %s274 = scalar_lea.vmem [#allocation4], %s273
        %p275 = pneg %p81
        %p276 = pneg %p78
        %p277 = scmp.lt.s32.totalorder %s27, 3
        %s278 = scalar_select %p277, %s27, 3
        %s279 = scalar_lea.vmem %s2, %s278
        %p280 = pneg %p107
        %p281 = pneg %p104
        %s282 = smul.u32 16, %s27
        %p283 = scmp.lt.s32.totalorder %s282, 63
        %s284 = scalar_select %p283, %s282, 63
        %s285 = smul.addr %s284, 8
        %s286 = scalar_lea.vmem %s3, %s285
        %p287 = pneg %p133
        %p288 = pneg %p130
        %p289 = pneg %p154
        %p290 = pneg %p151
        %p291 = pneg %p180
        %p292 = pneg %p177
        %s293 = sand.u32 %s167, 1
        %s294 = scalar_lea.sflag [#allocation6], %s293
        %s295 = sand.u32 %s167, 1
        %s296 = smul.addr %s295, 8
        %s297 = scalar_lea.vmem [#allocation7], %s296
        %p298 = scmp.lt.s32.totalorder %s26, 1
        %s299 = scalar_select %p298, %s26, 1
        %s300 = smul.addr %s299, 4
        %s301 = smul.addr %s300, 8
        %s302 = scalar_lea.vmem %s0, %s301
        %p303 = scmp.lt.s32.totalorder %s27, 3
        %s304 = scalar_select %p303, %s27, 3
        %s305 = scalar_lea.vmem %s2, %s304
        %s306 = smul.u32 16, %s27
        %p307 = scmp.lt.s32.totalorder %s306, 63
        %s308 = scalar_select %p307, %s306, 63
        %s309 = smul.addr %s308, 8
        %s310 = scalar_lea.vmem %s3, %s309
        %s311 = smul.u32 16, %s27
        %p312 = scmp.eq.s32.totalorder %s27, 0
        // Predicated region
        $region45: #{tpu_custom_call.1} parent=39 // pred_check
          %p313 = pneg %p312
        $region46: #{tpu_custom_call.1} parent=39 // pred_check_branch
          %315 = sbr.rel (%p313) target = $region48
        $region47: #{tpu_custom_call.1} parent=39 // pred_region
          %vm316 = vcmask 523264
          %317 = vst.msk [vmem:[#allocation3] sm:$0xff] %vm316, 0.0
          %v318 = vld [vmem:[%s302] sm:$0xff]
          %v319 = vmul.f32 %v318, %v318
          %320 = vadd.xlane.f32.xlu0 %v319
          %v321 = vpop.xlane.xlu0 %320
          %v322 = vrcp.pop 128.0
          %v323 = vmul.f32 128.0, %v322
          %v324 = vsub.f32 1.0, %v323
          %v325 = vmul.f32 %v322, %v324
          %v326 = vadd.f32 %v322, %v325
          %vm327 = vweird.f32 %v322
          %v328 = vsel %vm327, %v322, %v326
          %v329 = vmul.f32 %v321, %v328
          %v330 = vadd.f32 %v329, 1e-06
          %v331 = vrsqrt.pop %v330
          %v332 = vmul.f32 %v331, %v330
          %v333 = vmul.f32 %v332, %v331
          %v334 = vmul.f32 0.5, %v333
          %v335 = vsub.f32 1.5, %v334
          %v336 = vmul.f32 %v331, %v335
          %vm337 = vweird.f32 %v330
          %vm338 = vweird.f32 %v331
          %vm339 = vmor %vm337, %vm338
          %v340 = vsel %vm339, %v331, %v336
          %v341 = vmul.f32 %v318, %v340
          %342 = vst [vmem:[#allocation2] sm:$0xff] %v341
          %v343 = vld [vmem:[%s302 + $0x8] sm:$0xff]
          %v344 = vmul.f32 %v343, %v343
          %345 = vadd.xlane.f32.xlu0 %v344
          %v346 = vpop.xlane.xlu0 %345
          %v347 = vmul.f32 %v346, %v328
          %v348 = vadd.f32 %v347, 1e-06
          %v349 = vrsqrt.pop %v348
          %v350 = vmul.f32 %v349, %v348
          %v351 = vmul.f32 %v350, %v349
          %v352 = vmul.f32 0.5, %v351
          %v353 = vsub.f32 1.5, %v352
          %v354 = vmul.f32 %v349, %v353
          %vm355 = vweird.f32 %v348
          %vm356 = vweird.f32 %v349
          %vm357 = vmor %vm355, %vm356
          %v358 = vsel %vm357, %v349, %v354
          %v359 = vmul.f32 %v343, %v358
          %360 = vst [vmem:[#allocation2 + $0x8] sm:$0xff] %v359
          %v361 = vld [vmem:[%s302 + $0x10] sm:$0xff]
          %v362 = vmul.f32 %v361, %v361
          %363 = vadd.xlane.f32.xlu0 %v362
          %v364 = vpop.xlane.xlu0 %363
          %v365 = vmul.f32 %v364, %v328
          %v366 = vadd.f32 %v365, 1e-06
          %v367 = vrsqrt.pop %v366
          %v368 = vmul.f32 %v367, %v366
          %v369 = vmul.f32 %v368, %v367
          %v370 = vmul.f32 0.5, %v369
          %v371 = vsub.f32 1.5, %v370
          %v372 = vmul.f32 %v367, %v371
          %vm373 = vweird.f32 %v366
          %vm374 = vweird.f32 %v367
          %vm375 = vmor %vm373, %vm374
          %v376 = vsel %vm375, %v367, %v372
          %v377 = vmul.f32 %v361, %v376
          %378 = vst [vmem:[#allocation2 + $0x10] sm:$0xff] %v377
          %v379 = vld [vmem:[%s302 + $0x18] sm:$0xff]
          %v380 = vmul.f32 %v379, %v379
          %381 = vadd.xlane.f32.xlu0 %v380
          %v382 = vpop.xlane.xlu0 %381
          %v383 = vmul.f32 %v382, %v328
          %v384 = vadd.f32 %v383, 1e-06
          %v385 = vrsqrt.pop %v384
          %v386 = vmul.f32 %v385, %v384
          %v387 = vmul.f32 %v386, %v385
          %v388 = vmul.f32 0.5, %v387
          %v389 = vsub.f32 1.5, %v388
          %v390 = vmul.f32 %v385, %v389
          %vm391 = vweird.f32 %v384
          %vm392 = vweird.f32 %v385
          %vm393 = vmor %vm391, %vm392
          %v394 = vsel %vm393, %v385, %v390
          %v395 = vmul.f32 %v379, %v394
          %396 = vst [vmem:[#allocation2 + $0x18] sm:$0xff] %v395
        $region48: #{tpu_custom_call.1} parent=39 // pred_fallthru
          _
        %v397 = vld [vmem:[#allocation2] sm:$0xff]
        %v398 = vld [vmem:[#allocation2 + $0x8] sm:$0xff]
        %v399 = vld [vmem:[#allocation2 + $0x10] sm:$0xff]
        %v400 = vld [vmem:[#allocation2 + $0x18] sm:$0xff]
        %v401 = vld [vmem:[%s257] sm:$0xff]
        %v402 = vld [vmem:[%s257 + $0x8] sm:$0xff]
        %v403 = vld [vmem:[%s257 + $0x10] sm:$0xff]
        %v404 = vld [vmem:[%s257 + $0x18] sm:$0xff]
        %v405 = vld [vmem:[%s257 + $0x20] sm:$0xff]
        %v406 = vld [vmem:[%s257 + $0x28] sm:$0xff]
        %v407 = vld [vmem:[%s257 + $0x30] sm:$0xff]
        %v408 = vld [vmem:[%s257 + $0x38] sm:$0xff]
        %v409 = vld [vmem:[%s257 + $0x40] sm:$0xff]
        %v410 = vld [vmem:[%s257 + $0x48] sm:$0xff]
        %v411 = vld [vmem:[%s257 + $0x50] sm:$0xff]
        %v412 = vld [vmem:[%s257 + $0x58] sm:$0xff]
        %v413 = vld [vmem:[%s257 + $0x60] sm:$0xff]
        %v414 = vld [vmem:[%s257 + $0x68] sm:$0xff]
        %v415 = vld [vmem:[%s257 + $0x70] sm:$0xff]
        %v416 = vld [vmem:[%s257 + $0x78] sm:$0xff]
        %v417 = vld [vmem:[%s257 + $0x80] sm:$0xff]
        %v418 = vld [vmem:[%s257 + $0x88] sm:$0xff]
        %v419 = vld [vmem:[%s257 + $0x90] sm:$0xff]
        %v420 = vld [vmem:[%s257 + $0x98] sm:$0xff]
        %v421 = vld [vmem:[%s257 + $0xa0] sm:$0xff]
        %v422 = vld [vmem:[%s257 + $0xa8] sm:$0xff]
        %v423 = vld [vmem:[%s257 + $0xb0] sm:$0xff]
        %v424 = vld [vmem:[%s257 + $0xb8] sm:$0xff]
        %v425 = vld [vmem:[%s257 + $0xc0] sm:$0xff]
        %v426 = vld [vmem:[%s257 + $0xc8] sm:$0xff]
        %v427 = vld [vmem:[%s257 + $0xd0] sm:$0xff]
        %v428 = vld [vmem:[%s257 + $0xd8] sm:$0xff]
        %v429 = vld [vmem:[%s257 + $0xe0] sm:$0xff]
        %v430 = vld [vmem:[%s257 + $0xe8] sm:$0xff]
        %v431 = vld [vmem:[%s257 + $0xf0] sm:$0xff]
        %v432 = vld [vmem:[%s257 + $0xf8] sm:$0xff]
        %v433 = vld [vmem:[%s257 + $0x100] sm:$0xff]
        %v434 = vld [vmem:[%s257 + $0x108] sm:$0xff]
        %v435 = vld [vmem:[%s257 + $0x110] sm:$0xff]
        %v436 = vld [vmem:[%s257 + $0x118] sm:$0xff]
        %v437 = vld [vmem:[%s257 + $0x120] sm:$0xff]
        %v438 = vld [vmem:[%s257 + $0x128] sm:$0xff]
        %v439 = vld [vmem:[%s257 + $0x130] sm:$0xff]
        %v440 = vld [vmem:[%s257 + $0x138] sm:$0xff]
        %v441 = vld [vmem:[%s257 + $0x140] sm:$0xff]
        %v442 = vld [vmem:[%s257 + $0x148] sm:$0xff]
        %v443 = vld [vmem:[%s257 + $0x150] sm:$0xff]
        %v444 = vld [vmem:[%s257 + $0x158] sm:$0xff]
        %v445 = vld [vmem:[%s257 + $0x160] sm:$0xff]
        %v446 = vld [vmem:[%s257 + $0x168] sm:$0xff]
        %v447 = vld [vmem:[%s257 + $0x170] sm:$0xff]
        %v448 = vld [vmem:[%s257 + $0x178] sm:$0xff]
        %v449 = vld [vmem:[%s257 + $0x180] sm:$0xff]
        %v450 = vld [vmem:[%s257 + $0x188] sm:$0xff]
        %v451 = vld [vmem:[%s257 + $0x190] sm:$0xff]
        %v452 = vld [vmem:[%s257 + $0x198] sm:$0xff]
        %v453 = vld [vmem:[%s257 + $0x1a0] sm:$0xff]
        %v454 = vld [vmem:[%s257 + $0x1a8] sm:$0xff]
        %v455 = vld [vmem:[%s257 + $0x1b0] sm:$0xff]
        %v456 = vld [vmem:[%s257 + $0x1b8] sm:$0xff]
        %v457 = vld [vmem:[%s257 + $0x1c0] sm:$0xff]
        %v458 = vld [vmem:[%s257 + $0x1c8] sm:$0xff]
        %v459 = vld [vmem:[%s257 + $0x1d0] sm:$0xff]
        %v460 = vld [vmem:[%s257 + $0x1d8] sm:$0xff]
        %v461 = vld [vmem:[%s257 + $0x1e0] sm:$0xff]
        %v462 = vld [vmem:[%s257 + $0x1e8] sm:$0xff]
        %v463 = vld [vmem:[%s257 + $0x1f0] sm:$0xff]
        %v464 = vld [vmem:[%s257 + $0x1f8] sm:$0xff]
        %v465 = vld [vmem:[%s305] sm:$0x1]
        %v467 = vperm.slane %v465, 0
        %469 = vmatpush.msra.mxu0 %v416
        %470 = vmatpush.msra.mxu0 %v415
        %471 = vmatpush.msra.mxu0 %v414
        %472 = vmatpush.msra.mxu0 %v413
        %473 = vmatpush.msra.mxu0 %v412
        %474 = vmatpush.msra.mxu0 %v411
        %475 = vmatpush.msra.mxu0 %v410
        %476 = vmatpush.msra.mxu0 %v409
        %477 = vmatpush.msra.mxu0 %v408
        %478 = vmatpush.msra.mxu0 %v407
        %479 = vmatpush.msra.mxu0 %v406
        %480 = vmatpush.msra.mxu0 %v405
        %481 = vmatpush.msra.mxu0 %v404
        %482 = vmatpush.msra.mxu0 %v403
        %483 = vmatpush.msra.mxu0 %v402
        %484 = vmatpush.msra.mxu0 %v401
        %485 = vmatmul.f32.gmra.mxu0 %v397
        %v486 = vpop.f32.mrf.mxu0
        %v487 = vadd.f32 %v467, %v486
        %488 = vdwg.mxu0
        %489 = vmatpush.msra.mxu0 %v432
        %490 = vmatpush.msra.mxu0 %v431
        %491 = vmatpush.msra.mxu0 %v430
        %492 = vmatpush.msra.mxu0 %v429
        %493 = vmatpush.msra.mxu0 %v428
        %494 = vmatpush.msra.mxu0 %v427
        %495 = vmatpush.msra.mxu0 %v426
        %496 = vmatpush.msra.mxu0 %v425
        %497 = vmatpush.msra.mxu0 %v424
        %498 = vmatpush.msra.mxu0 %v423
        %499 = vmatpush.msra.mxu0 %v422
        %500 = vmatpush.msra.mxu0 %v421
        %501 = vmatpush.msra.mxu0 %v420
        %502 = vmatpush.msra.mxu0 %v419
        %503 = vmatpush.msra.mxu0 %v418
        %504 = vmatpush.msra.mxu0 %v417
        %505 = vmatmul.f32.gmra.mxu0 %v398
        %v506 = vpop.f32.mrf.mxu0
        %v507 = vadd.f32 %v487, %v506
        %508 = vdwg.mxu0
        %509 = vmatpush.msra.mxu0 %v448
        %510 = vmatpush.msra.mxu0 %v447
        %511 = vmatpush.msra.mxu0 %v446
        %512 = vmatpush.msra.mxu0 %v445
        %513 = vmatpush.msra.mxu0 %v444
        %514 = vmatpush.msra.mxu0 %v443
        %515 = vmatpush.msra.mxu0 %v442
        %516 = vmatpush.msra.mxu0 %v441
        %517 = vmatpush.msra.mxu0 %v440
        %518 = vmatpush.msra.mxu0 %v439
        %519 = vmatpush.msra.mxu0 %v438
        %520 = vmatpush.msra.mxu0 %v437
        %521 = vmatpush.msra.mxu0 %v436
        %522 = vmatpush.msra.mxu0 %v435
        %523 = vmatpush.msra.mxu0 %v434
        %524 = vmatpush.msra.mxu0 %v433
        %525 = vmatmul.f32.gmra.mxu0 %v399
        %v526 = vpop.f32.mrf.mxu0
        %v527 = vadd.f32 %v507, %v526
        %528 = vdwg.mxu0
        %529 = vmatpush.msra.mxu0 %v464
        %530 = vmatpush.msra.mxu0 %v463
        %531 = vmatpush.msra.mxu0 %v462
        %532 = vmatpush.msra.mxu0 %v461
        %533 = vmatpush.msra.mxu0 %v460
        %534 = vmatpush.msra.mxu0 %v459
        %535 = vmatpush.msra.mxu0 %v458
        %536 = vmatpush.msra.mxu0 %v457
        %537 = vmatpush.msra.mxu0 %v456
        %538 = vmatpush.msra.mxu0 %v455
        %539 = vmatpush.msra.mxu0 %v454
        %540 = vmatpush.msra.mxu0 %v453
        %541 = vmatpush.msra.mxu0 %v452
        %542 = vmatpush.msra.mxu0 %v451
        %543 = vmatpush.msra.mxu0 %v450
        %544 = vmatpush.msra.mxu0 %v449
        %545 = vmatmul.f32.gmra.mxu0 %v400
        %v546 = vpop.f32.mrf.mxu0
        %v547 = vadd.f32 %v527, %v546
        %548 = vdwg.mxu0
        %v549 = vmul.f32 %v547, 0.5
        %v550 = vmul.f32 %v547, 0.70710677
        %v551 = vmul.f32 %v550, %v550
        %v552 = vmin.f32 16.0, %v551
        %v553 = vmul.f32 %v552, 2.1237322e-06
        %v554 = vadd.f32 %v553, 0.00028619796
        %v555 = vmul.f32 %v552, %v554
        %v556 = vadd.f32 %v555, 0.0036580483
        %v557 = vmul.f32 %v552, %v556
        %v558 = vadd.f32 %v557, 0.05243302
        %v559 = vmul.f32 %v552, %v558
        %v560 = vadd.f32 %v559, 0.18741608
        %v561 = vmul.f32 %v552, %v560
        %v562 = vadd.f32 %v561, 1.1283791
        %v563 = vmul.f32 %v550, %v562
        %v564 = vmul.f32 %v552, 3.8918573e-05
        %v565 = vadd.f32 %v564, 0.001143296
        %v566 = vmul.f32 %v552, %v565
        %v567 = vadd.f32 %v566, 0.014752088
        %v568 = vmul.f32 %v552, %v567
        %v569 = vadd.f32 %v568, 0.112945676
        %v570 = vmul.f32 %v552, %v569
        %v571 = vadd.f32 %v570, 0.4994258
        %v572 = vmul.f32 %v552, %v571
        %v573 = vadd.f32 %v572, 1.0
        %v574 = vrcp.pop %v573
        %v575 = vmul.f32 %v573, %v574
        %v576 = vsub.f32 1.0, %v575
        %v577 = vmul.f32 %v574, %v576
        %v578 = vadd.f32 %v574, %v577
        %vm579 = vweird.f32 %v573
        %vm580 = vweird.f32 %v574
        %vm581 = vmor %vm579, %vm580
        %v582 = vsel %vm581, %v574, %v578
        %v583 = vand.u32 2147483647, %v573
        %vm584 = vcmp.eq.f32.partialorder %v583, 8.507059e+37
        %v585 = vand.u32 %v573, 2147483648
        %v586 = vor.u32 1.1754944e-38, %v585
        %v587 = vsel %vm584, %v586, %v582
        %v588 = vmul.f32 %v563, %v587
        %v589 = vmin.f32 %v588, 1.0
        %v590 = vmax.f32 %v589, -1.0
        %v591 = vadd.f32 %v590, 1.0
        %v592 = vmul.f32 %v549, %v591
        %v593 = vld [vmem:[#allocation3] sm:$0xff]
        %v594 = vld [vmem:[%s310] sm:$0xff]
        %v595 = vld [vmem:[%s310 + $0x8] sm:$0xff]
        %v596 = vld [vmem:[%s310 + $0x10] sm:$0xff]
        %v597 = vld [vmem:[%s310 + $0x18] sm:$0xff]
        %v598 = vld [vmem:[%s310 + $0x20] sm:$0xff]
        %v599 = vld [vmem:[%s310 + $0x28] sm:$0xff]
        %v600 = vld [vmem:[%s310 + $0x30] sm:$0xff]
        %v601 = vld [vmem:[%s310 + $0x38] sm:$0xff]
        %v602 = vld [vmem:[%s310 + $0x40] sm:$0xff]
        %v603 = vld [vmem:[%s310 + $0x48] sm:$0xff]
        %v604 = vld [vmem:[%s310 + $0x50] sm:$0xff]
        %v605 = vld [vmem:[%s310 + $0x58] sm:$0xff]
        %v606 = vld [vmem:[%s310 + $0x60] sm:$0xff]
        %v607 = vld [vmem:[%s310 + $0x68] sm:$0xff]
        %v608 = vld [vmem:[%s310 + $0x70] sm:$0xff]
        %v609 = vld [vmem:[%s310 + $0x78] sm:$0xff]
        %610 = vmatpush.msra.mxu0 %v609
        %611 = vmatpush.msra.mxu0 %v608
        %612 = vmatpush.msra.mxu0 %v607
        %613 = vmatpush.msra.mxu0 %v606
        %614 = vmatpush.msra.mxu0 %v605
        %615 = vmatpush.msra.mxu0 %v604
        %616 = vmatpush.msra.mxu0 %v603
        %617 = vmatpush.msra.mxu0 %v602
        %618 = vmatpush.msra.mxu0 %v601
        %619 = vmatpush.msra.mxu0 %v600
        %620 = vmatpush.msra.mxu0 %v599
        %621 = vmatpush.msra.mxu0 %v598
        %622 = vmatpush.msra.mxu0 %v597
        %623 = vmatpush.msra.mxu0 %v596
        %624 = vmatpush.msra.mxu0 %v595
        %625 = vmatpush.msra.mxu0 %v594
        %626 = vmatmul.f32.gmra.mxu0 %v592
        %v627 = vpop.f32.mrf.mxu0
        %v628 = vadd.f32 0.0, %v627
        %629 = vdwg.mxu0
        %v630 = vadd.f32 %v593, %v628
        %vm631 = vcmask 523264
        %632 = vst.msk [vmem:[#allocation3] sm:$0xff] %vm631, %v630
        %p633 = scmp.eq.s32.totalorder %s27, 3
        // Predicated region
        $region49: #{tpu_custom_call.1} parent=39 // pred_check
          %p634 = pneg %p633
        $region50: #{tpu_custom_call.1} parent=39 // pred_check_branch
          %636 = sbr.rel (%p634) target = $region52
        $region51: #{tpu_custom_call.1} parent=39 // pred_region
          %v637 = vld [vmem:[#allocation3] sm:$0xff]
          %v638 = vld [vmem:[%s4] sm:$0x1]
          %v640 = vperm.slane %v638, 0
          %v642 = vadd.f32 %v637, %v640
          %643 = vst.msk [vmem:[%s297] sm:$0xff] %vm631, %v642
        $region52: #{tpu_custom_call.1} parent=39 // pred_fallthru
          _
        %s644 = sand.u32 %s167, 1
        %s645 = scalar_lea.sflag [#allocation6], %s644
        %s646 = sand.u32 %s167, 1
        %s647 = smul.addr %s646, 8
        %s648 = scalar_lea.vmem [#allocation7], %s647
        // Predicated region
        $region53: #{tpu_custom_call.1} parent=39 // pred_check
          %p649 = pneg %p177
        $region54: #{tpu_custom_call.1} parent=39 // pred_check_branch
          %651 = sbr.rel (%p649) target = $region56
        $region55: #{tpu_custom_call.1} parent=39 // pred_region
          %653 = vsyncadd %s645, 0
          %s654 = smul.addr %s26, 8
          %s655 = scalar_lea.hbm %s5, %s654
          %s657 = sshll.u32 %s648, 4
          %s658 = int_to_ptr.vmem [resolvable:$true] %s657
          %s659 = sshll.u32 %s655, 4
          %s660 = int_to_ptr.hbm [resolvable:$true] %s659
          %662 = dma.vmem_to_hbm [thread:$0]  %s658, 128, %s660, %s645
        $region56: #{tpu_custom_call.1} parent=39 // pred_fallthru
          _
      $region40: #{tpu_custom_call.1} parent=5 // pred_fallthru
        _
      %p663 = scmp.le.s32.totalorder 2, %s17
      // Predicated region
      $region57: #{tpu_custom_call.1} parent=5 // pred_check
        %p664 = pneg %p663
      $region58: #{tpu_custom_call.1} parent=5 // pred_check_branch
        %666 = sbr.rel (%p664) target = $region60
      $region59: #{tpu_custom_call.1} parent=5 // pred_region
        %s667 = ssub.s32 %s17, 2
        // Predicated region
        $region61: #{tpu_custom_call.1} parent=59 // pred_check
          %p668 = pneg %p183
        $region62: #{tpu_custom_call.1} parent=59 // pred_check_branch
          %670 = sbr.rel (%p668) target = $region64
        $region63: #{tpu_custom_call.1} parent=59 // pred_region
          %s671 = sand.u32 %s168, 1
          %s672 = scalar_lea.sflag [#allocation6], %s671
          %s673 = sand.u32 %s168, 1
          %s674 = smul.addr %s673, 8
          %s675 = scalar_lea.vmem [#allocation7], %s674
          %677 = dma.done %s672, 128
        $region64: #{tpu_custom_call.1} parent=59 // pred_fallthru
          _
      $region60: #{tpu_custom_call.1} parent=5 // pred_fallthru
        _
    $region6: #{tpu_custom_call.1} parent=1 // loop_footer
      %s21 = sadd.s32 1, %s17
    $region7: #{tpu_custom_call.1} parent=1 // loop_footer_branch
      %16 = sbr.rel target = $region3
    $region8: #{tpu_custom_call.1} parent=1 // loop_exit
      _
    %678 = vsyncpa [#allocation5], 1
    %s679 = scalar_lea.sflag [#allocation5], 1
    %680 = vsyncpa %s679, 1
    %681 = vsyncpa [#allocation6], 1
    %s682 = scalar_lea.sflag [#allocation6], 1
    %683 = vsyncpa %s682, 1

</llo_original>
